<compile_context>
chip_gen: v6e
topology: v6e:2x2x1
jax: 0.10.0
libtpu: 0.0.40
codegen_flags: <defaults>
</compile_context>

<pallas_src>
import functools

import jax
import jax.numpy as jnp
from jax.experimental import pallas as pl
from jax.experimental.pallas import tpu as pltpu


def _round_up(n, m):
    return (n + m - 1) // m * m


def _center_loss_kernel(labels_ref, x_ref, centers_ref, part_ref, *,
                        batch_size, num_classes_padded, tile_b):
    """Accumulate sum_i clip(||x_i - c_{label_i}||^2, 1e-12, 1e12) per partial."""
    p = pl.program_id(0)          # partial index  (parallel axis)
    i = pl.program_id(1)          # batch-tile index within the partial (arbitrary)
    n_i = pl.num_programs(1)

    # Output block index is constant across axis 1 -> VMEM-resident accumulator.
    @pl.when(i == 0)
    def _init():
        part_ref[...] = jnp.zeros_like(part_ref)

    x = x_ref[...].astype(jnp.float32)              # (tile_b, D)
    centers = centers_ref[...].astype(jnp.float32)  # (C_pad, D), VMEM-resident
    labels = labels_ref[...]                        # (tile_b, 1) int32

    # In-kernel gather of each row's center as a one-hot matmul on the MXU.
    # Padded classes (>= true num_classes) never match a real label.
    cls = jax.lax.broadcasted_iota(jnp.int32, (tile_b, num_classes_padded), 1)
    onehot = (labels == cls).astype(jnp.float32)                       # (tile_b, C_pad)
    c_sel = jnp.dot(onehot, centers, preferred_element_type=jnp.float32)  # (tile_b, D)

    diff = x - c_sel
    d = jnp.sum(diff * diff, axis=1, keepdims=True)                    # (tile_b, 1)

    # Rows beyond the real batch are padding and must contribute exactly 0.
    row0 = (p * n_i + i) * tile_b
    row = row0 + jax.lax.broadcasted_iota(jnp.int32, (tile_b, 1), 0)
    valid = row < batch_size

    contrib = jnp.where(valid, jnp.clip(d, 1e-12, 1.0e12), 0.0)        # (tile_b, 1)

    part_ref[0:1, 0:1] += jnp.sum(contrib, axis=0, keepdims=True)      # (1, 1)


def _pick_tile_b(batch, feat_dim, num_classes_padded):
    """~512 KiB of feature rows per tile, bounded by the one-hot temp (<= ~4 MiB)."""
    tb = (512 * 1024) // (4 * max(feat_dim, 1))
    tb = min(tb, (4 * 1024 * 1024) // (4 * max(num_classes_padded, 128)))
    tb = max(8, min(tb, 8192))
    return min(_round_up(tb, 8), _round_up(batch, 8))


def center_loss(x, labels, centers, *, n_partials=2):
    """x: (B, D) float, labels: (B,) int, centers: (C, D) float -> scalar loss."""
    B, D = x.shape
    C, Dc = centers.shape
    assert D == Dc, "feature dims of x and centers must match"

    labels2d = labels.astype(jnp.int32).reshape(B, 1)

    # Pad the class dim to a multiple of 8 so the one-hot matmul K is aligned.
    c_pad = _round_up(C, 8)
    if c_pad != C:
        centers = jnp.pad(centers, ((0, c_pad - C), (0, 0)))

    # Batch tiling: multiples of 8 sublanes; split tiles across `n_partials`
    # independent accumulators (clamped so tiny batches run a single step).
    tb = _pick_tile_b(B, D, c_pad)
    n_part = max(1, min(n_partials, pl.cdiv(B, tb)))
    n_tiles = _round_up(pl.cdiv(B, tb), n_part)
    tiles_per_part = n_tiles // n_part
    b_pad = n_tiles * tb
    if b_pad != B:
        x = jnp.pad(x, ((0, b_pad - B), (0, 0)))
        labels2d = jnp.pad(labels2d, ((0, b_pad - B), (0, 0)))

    kernel = functools.partial(_center_loss_kernel, batch_size=B,
                               num_classes_padded=c_pad, tile_b=tb)

    row_map = lambda p, i: (p * tiles_per_part + i, 0)
    lbl_spec = pl.BlockSpec((tb, 1), row_map)
    x_spec = pl.BlockSpec((tb, D), row_map)
    ctr_spec = pl.BlockSpec((c_pad, D), lambda p, i: (0, 0))   # VMEM-resident
    # (8, 128)-aligned per-partial output slab; only [p*8, 0] is nonzero.
    out_spec = pl.BlockSpec((8, 128), lambda p, i: (p, 0))

    bytes_accessed = (b_pad * D * x.dtype.itemsize          # features
                      + b_pad * 4                            # labels
                      + c_pad * D * centers.dtype.itemsize   # centers (once)
                      + n_part * 8 * 128 * 4)                # partial outputs
    cost = pl.CostEstimate(flops=2 * B * c_pad * D + 3 * B * D,
                           transcendentals=0, bytes_accessed=bytes_accessed)

    partials = pl.pallas_call(
        kernel,
        out_shape=jax.ShapeDtypeStruct((n_part * 8, 128), jnp.float32),
        grid_spec=pltpu.PrefetchScalarGridSpec(
            num_scalar_prefetch=0,
            grid=(n_part, tiles_per_part),
            in_specs=[lbl_spec, x_spec, ctr_spec],
            out_specs=out_spec,
        ),
        compiler_params=pltpu.CompilerParams(
            dimension_semantics=("parallel", "arbitrary"),
        ),
        cost_estimate=cost,
    )(labels2d, x, centers)

    # All entries except one per partial block are zero, so a plain sum works.
    return jnp.sum(partials) / jnp.float32(B)


if __name__ == "__main__":
    # Module defaults: num_classes=10, feat_dim=2.  Small deterministic shapes.
    num_classes = 10
    feat_dim = 2
    batch = 8

    key = jax.random.PRNGKey(0)
    k_x, k_c, k_l = jax.random.split(key, 3)

    # Stands in for the module's torch.randn centers parameter.
    centers = jax.random.normal(k_c, (num_classes, feat_dim), dtype=jnp.float32)
    x = jax.random.normal(k_x, (batch, feat_dim), dtype=jnp.float32)
    labels = jax.random.randint(k_l, (batch,), 0, num_classes, dtype=jnp.int32)

    loss = center_loss(x, labels, centers)
    loss = jax.block_until_ready(loss)

    # Pure-JAX reference faithful to the PyTorch formulation.
    distmat = (
        jnp.sum(x * x, axis=1, keepdims=True)
        + jnp.sum(centers * centers, axis=1, keepdims=True).T
        - 2.0 * x @ centers.T
    )
    ref = jnp.mean(jnp.clip(distmat[jnp.arange(batch), labels], 1e-12, 1.0e12))
    assert jnp.allclose(loss, ref, rtol=1e-5, atol=1e-5), (loss, ref)

    print("KERNEL_OK")
</pallas_src>

<mosaic_0001>
module attributes {stable_mosaic.version = 11 : i64} {
  func.func @_center_loss_kernel(%arg0: i32, %arg1: i32, %arg2: memref<8x1xi32, #tpu.memory_space<vmem>>, %arg3: memref<8x2xf32, #tpu.memory_space<vmem>>, %arg4: memref<16x2xf32, #tpu.memory_space<vmem>>, %arg5: memref<8x128xf32, #tpu.memory_space<vmem>>) attributes {dimension_semantics = [#tpu.dimension_semantics<parallel>, #tpu.dimension_semantics<arbitrary>], iteration_bounds = array<i64: 1, 1>, scalar_prefetch = 0 : i64, scratch_operands = 0 : i64, tpu.core_type = #tpu.core_type<tc>, window_params = [{transform_indices = @transform_0, window_bounds = array<i64: 8, 1>}, {transform_indices = @transform_1, window_bounds = array<i64: 8, 2>}, {pipeline_mode = #tpu.pipeline_mode<synchronous>, transform_indices = @transform_2, window_bounds = array<i64: 16, 2>}, {transform_indices = @transform_3, window_bounds = array<i64: 8, 128>}]} {
    %c0_i32 = arith.constant 0 : i32
    %0 = arith.cmpi eq, %arg1, %c0_i32 : i32
    %1 = arith.extui %0 : i1 to i32
    %c0_i32_0 = arith.constant 0 : i32
    %2 = arith.cmpi ne, %1, %c0_i32_0 : i32
    scf.if %2 {
      %cst_16 = arith.constant 0.000000e+00 : f32
      %35 = vector.broadcast %cst_16 : f32 to vector<8x128xf32>
      %c0_17 = arith.constant 0 : index
      %c0_18 = arith.constant 0 : index
      %36 = vector.load %arg5[%c0_17, %c0_18] : memref<8x128xf32, #tpu.memory_space<vmem>>, vector<8x128xf32>
      tpu.vector_store %arg5[%c0_17, %c0_18], %35 {strides = array<i32>} : memref<8x128xf32, #tpu.memory_space<vmem>>, vector<8x128xf32>,
    } else {
    }
    %c0 = arith.constant 0 : index
    %c0_1 = arith.constant 0 : index
    %3 = vector.load %arg3[%c0, %c0_1] : memref<8x2xf32, #tpu.memory_space<vmem>>, vector<8x2xf32>
    %c0_2 = arith.constant 0 : index
    %c0_3 = arith.constant 0 : index
    %4 = vector.load %arg4[%c0_2, %c0_3] : memref<16x2xf32, #tpu.memory_space<vmem>>, vector<16x2xf32>
    %c0_4 = arith.constant 0 : index
    %c0_5 = arith.constant 0 : index
    %5 = vector.load %arg2[%c0_4, %c0_5] : memref<8x1xi32, #tpu.memory_space<vmem>>, vector<8x1xi32>
    %6 = tpu.iota {dimensions = array<i32: 1>} : vector<8x16xi32>
    %7 = vector.broadcast %5 : vector<8x1xi32> to vector<8x16xi32>
    %8 = arith.cmpi eq, %7, %6 : vector<8x16xi32>
    %9 = arith.extui %8 : vector<8x16xi1> to vector<8x16xi32>
    %10 = arith.sitofp %9 : vector<8x16xi32> to vector<8x16xf32>
    %cst = arith.constant dense<0.000000e+00> : vector<8x2xf32>
    %11 = tpu.matmul %10, %4, %cst {dimension_numbers = #tpu.dot_dimension_numbers<[1], [0], [0], [1], [0, 0, 1, 1], [], []>} : vector<8x16xf32>, vector<16x2xf32>, vector<8x2xf32> -> vector<8x2xf32>
    %12 = arith.subf %3, %11 : vector<8x2xf32>
    %13 = arith.mulf %12, %12 : vector<8x2xf32>
    %cst_6 = arith.constant dense<0.000000e+00> : vector<8xf32>
    %14 = vector.multi_reduction <add>, %13, %cst_6 [1] : vector<8x2xf32> to vector<8xf32>
    %15 = vector.shape_cast %14 : vector<8xf32> to vector<8x1xf32>
    %c1_i32 = arith.constant 1 : i32
    %16 = arith.muli %arg0, %c1_i32 : i32
    %17 = arith.addi %16, %arg1 : i32
    %c8_i32 = arith.constant 8 : i32
    %18 = arith.muli %17, %c8_i32 : i32
    %19 = tpu.iota {dimensions = array<i32: 0>} : vector<8x1xi32>
    %20 = vector.broadcast %18 : i32 to vector<8x1xi32>
    %21 = arith.addi %20, %19 : vector<8x1xi32>
    %c8_i32_7 = arith.constant 8 : i32
    %22 = vector.broadcast %c8_i32_7 : i32 to vector<8x1xi32>
    %23 = arith.cmpi slt, %21, %22 : vector<8x1xi32>
    %cst_8 = arith.constant 9.99999996E-13 : f32
    %cst_9 = arith.constant 9.99999995E+11 : f32
    %24 = vector.broadcast %cst_8 : f32 to vector<8x1xf32>
    %25 = arith.maximumf %24, %15 : vector<8x1xf32>
    %26 = vector.broadcast %cst_9 : f32 to vector<8x1xf32>
    %27 = arith.minimumf %26, %25 : vector<8x1xf32>
    %cst_10 = arith.constant 0.000000e+00 : f32
    %28 = vector.broadcast %cst_10 : f32 to vector<8x1xf32>
    %29 = arith.select %23, %27, %28 : vector<8x1xi1>, vector<8x1xf32>
    %c0_11 = arith.constant 0 : index
    %c0_12 = arith.constant 0 : index
    %30 = vector.load %arg5[%c0_11, %c0_12] : memref<8x128xf32, #tpu.memory_space<vmem>>, vector<1x1xf32>
    %cst_13 = arith.constant dense<0.000000e+00> : vector<1xf32>
    %31 = vector.multi_reduction <add>, %29, %cst_13 [0] : vector<8x1xf32> to vector<1xf32>
    %32 = vector.shape_cast %31 : vector<1xf32> to vector<1x1xf32>
    %33 = arith.addf %30, %32 : vector<1x1xf32>
    %c0_14 = arith.constant 0 : index
    %c0_15 = arith.constant 0 : index
    %34 = vector.load %arg5[%c0_14, %c0_15] : memref<8x128xf32, #tpu.memory_space<vmem>>, vector<1x1xf32>
    tpu.vector_store %arg5[%c0_14, %c0_15], %33 {strides = array<i32>} : memref<8x128xf32, #tpu.memory_space<vmem>>, vector<1x1xf32>,
    return
  }
  func.func @transform_0(%arg0: i32, %arg1: i32) -> (i32, i32) {
    %c1_i32 = arith.constant 1 : i32
    %0 = arith.muli %arg0, %c1_i32 : i32
    %1 = arith.addi %0, %arg1 : i32
    %c0_i32 = arith.constant 0 : i32
    %c0_i32_0 = arith.constant 0 : i32
    return %1, %c0_i32 : i32, i32
  }
  func.func @transform_1(%arg0: i32, %arg1: i32) -> (i32, i32) {
    %c1_i32 = arith.constant 1 : i32
    %0 = arith.muli %arg0, %c1_i32 : i32
    %1 = arith.addi %0, %arg1 : i32
    %c0_i32 = arith.constant 0 : i32
    %c0_i32_0 = arith.constant 0 : i32
    return %1, %c0_i32 : i32, i32
  }
  func.func @transform_2(%arg0: i32, %arg1: i32) -> (i32, i32) {
    %c0_i32 = arith.constant 0 : i32
    %c0_i32_0 = arith.constant 0 : i32
    %c0_i32_1 = arith.constant 0 : i32
    return %c0_i32, %c0_i32_0 : i32, i32
  }
  func.func @transform_3(%arg0: i32, %arg1: i32) -> (i32, i32) {
    %c0_i32 = arith.constant 0 : i32
    %c0_i32_0 = arith.constant 0 : i32
    return %arg0, %c0_i32 : i32, i32
  }
}

</mosaic_0001>

<llo_original>
// kernel: tpu_custom_call.1
$region0: #{tpu_custom_call.1}
  #allocation0 [shape = 'u32[]', space=smem, size = 0x4, offset = 0x4, fixed_abs, tag = 'smem constant byte address 0x4 - core index']
  #allocation1 [shape = 'u32[144,128]{1,0:T(1,128)}', space=vmem, size = 0x12000, scoped, tag = 'internal scratch']
  %s0 = inlined_call_operand.vmem [shape: s32[8,1], index: 0, kind: input, shape index: {}]
  %s1 = inlined_call_operand.vmem [shape: f32[8,2], index: 1, kind: input, shape index: {}]
  %s2 = inlined_call_operand.vmem [shape: f32[16,2], index: 2, kind: input, shape index: {}]
  %s3 = inlined_call_operand.hbm [shape: f32[8,128], index: 3, kind: output, shape index: {}]
  %s4 = sld [smem:[#allocation0]]
  $region26: #{tpu_custom_call.1} parent=0
    _
  %s6 = ssub.s32 1, %s4
  %s7 = scalar_select 0, %s6, %s4
  $region1: #{tpu_custom_call.1} parent=0
    #allocation2 [shape = 'u8[4096]{0}', space=vmem, size = 0x1000, scoped, tag = 'output window, operand 0, single buffered']
    #allocation3 [shape = 's32[1]{0}', space=sflag, size = 0x4, scoped, tag = 'scoped memory for tpu_custom_call.1']
    %8 = vsyncpa [#allocation3], 0
    // Predicated region
    $region2: #{tpu_custom_call.1} parent=1 // pred_check
      _
    $region3: #{tpu_custom_call.1} parent=1 // pred_check_branch
      %10 = sbr.rel (0) target = $region5
    $region4: #{tpu_custom_call.1} parent=1 // pred_region
      %s11 = sadd.s32 0, 0
      %p12 = scmp.lt.s32.totalorder %s11, 0
      %s13 = scalar_select %p12, %s11, 0
      %s14 = smul.addr %s13, 8
      %s15 = scalar_lea.vmem %s0, %s14
      %s16 = sadd.s32 0, 0
    $region5: #{tpu_custom_call.1} parent=1 // pred_fallthru
      _
    // Predicated region
    $region6: #{tpu_custom_call.1} parent=1 // pred_check
      _
    $region7: #{tpu_custom_call.1} parent=1 // pred_check_branch
      %18 = sbr.rel (0) target = $region9
    $region8: #{tpu_custom_call.1} parent=1 // pred_region
      %s19 = sadd.s32 0, 0
      %p20 = scmp.lt.s32.totalorder %s19, 0
      %s21 = scalar_select %p20, %s19, 0
      %s22 = smul.addr %s21, 8
      %s23 = scalar_lea.vmem %s1, %s22
      %s24 = sadd.s32 0, 0
    $region9: #{tpu_custom_call.1} parent=1 // pred_fallthru
      _
    // Predicated region
    $region10: #{tpu_custom_call.1} parent=1 // pred_check
      _
    $region11: #{tpu_custom_call.1} parent=1 // pred_check_branch
      %26 = sbr.rel (0) target = $region13
    $region12: #{tpu_custom_call.1} parent=1 // pred_region
      _
    $region13: #{tpu_custom_call.1} parent=1 // pred_fallthru
      _
    %s27 = sadd.s32 0, 0
    %p28 = scmp.lt.s32.totalorder %s27, 0
    %s29 = scalar_select %p28, %s27, 0
    %s30 = smul.addr %s29, 8
    %s31 = scalar_lea.vmem %s0, %s30
    %s32 = sadd.s32 0, 0
    %p33 = scmp.lt.s32.totalorder %s32, 0
    %s34 = scalar_select %p33, %s32, 0
    %s35 = smul.addr %s34, 8
    %s36 = scalar_lea.vmem %s1, %s35
    %s37 = sadd.s32 0, 0
    %p38 = scmp.lt.s32.totalorder %s37, 0
    %s39 = scalar_select %p38, %s37, 0
    %s40 = smul.addr %s39, 8
    %s41 = scalar_lea.vmem %s0, %s40
    %s42 = sadd.s32 0, 0
    %s43 = sadd.s32 0, 0
    %p44 = scmp.lt.s32.totalorder %s43, 0
    %s45 = scalar_select %p44, %s43, 0
    %s46 = smul.addr %s45, 8
    %s47 = scalar_lea.vmem %s1, %s46
    %s48 = sadd.s32 0, 0
    %p49 = scmp.eq.s32.totalorder 0, 0
    // Predicated region
    $region14: #{tpu_custom_call.1} parent=1 // pred_check
      %p50 = pneg %p49
    $region15: #{tpu_custom_call.1} parent=1 // pred_check_branch
      %52 = sbr.rel (%p50) target = $region17
    $region16: #{tpu_custom_call.1} parent=1 // pred_region
      %53 = vst [vmem:[#allocation2] sm:$0xff] 0.0
    $region17: #{tpu_custom_call.1} parent=1 // pred_fallthru
      _
    %v54 = vld [vmem:[%s47] sm:$0xff]
    %v55 = vld [vmem:[%s2] sm:$0xff]
    %v56 = vld [vmem:[%s2 + $0x8] sm:$0xff]
    %v57 = vld [vmem:[%s41] sm:$0xff]
    %v58 = vlaneseq
    %v59 = vand.u32 %v58, 127
    %60 = vset.pattern.permute.xlu0 0
    %61 = vperm.xlu0 %60, %v57
    %v62 = vpop.permute.xlu0 %61
    %vm63 = vcmp.eq.s32.totalorder %v62, %v59
    %v64 = vsel %vm63, 1, 0
    %v65 = vcvt.s32.f32 %v64
    %vm66 = vcmask 130048
    %v68 = vsel %vm66, %v65, 0
    %70 = vmatprep.subr.mxu0 0.0
    %71 = vmatpush1.msra.mxu0 0.0
    %72 = vmatprep.subr.mxu0 0.0
    %73 = vmatpush1.msra.mxu0 0.0
    %74 = vmatprep.subr.mxu0 0.0
    %75 = vmatpush1.msra.mxu0 0.0
    %76 = vmatprep.subr.mxu0 0.0
    %77 = vmatpush1.msra.mxu0 0.0
    %78 = vmatprep.subr.mxu0 0.0
    %79 = vmatpush1.msra.mxu0 0.0
    %80 = vmatprep.subr.mxu0 0.0
    %81 = vmatpush1.msra.mxu0 0.0
    %82 = vmatprep.subr.mxu0 0.0
    %83 = vmatpush1.msra.mxu0 0.0
    %84 = vmatprep.subr.mxu0 0.0
    %85 = vmatpush1.msra.mxu0 0.0
    %86 = vmatprep.subr.mxu0 0.0
    %87 = vmatpush1.msra.mxu0 0.0
    %88 = vmatprep.subr.mxu0 0.0
    %89 = vmatpush1.msra.mxu0 0.0
    %90 = vmatprep.subr.mxu0 0.0
    %91 = vmatpush1.msra.mxu0 0.0
    %92 = vmatprep.subr.mxu0 0.0
    %93 = vmatpush1.msra.mxu0 0.0
    %94 = vmatprep.subr.mxu0 0.0
    %95 = vmatpush1.msra.mxu0 0.0
    %96 = vmatprep.subr.mxu0 0.0
    %97 = vmatpush1.msra.mxu0 0.0
    %98 = vmatprep.subr.mxu0 0.0
    %99 = vmatpush1.msra.mxu0 %v56
    %100 = vmatprep.subr.mxu0 0.0
    %101 = vmatpush1.msra.mxu0 %v55
    %102 = vmatprep.subr.mxu0 0.0
    %103 = vmatpush2.msra.mxu0 0.0
    %104 = vmatprep.subr.mxu0 0.0
    %105 = vmatpush2.msra.mxu0 0.0
    %106 = vmatprep.subr.mxu0 0.0
    %107 = vmatpush2.msra.mxu0 0.0
    %108 = vmatprep.subr.mxu0 0.0
    %109 = vmatpush2.msra.mxu0 0.0
    %110 = vmatprep.subr.mxu0 0.0
    %111 = vmatpush2.msra.mxu0 0.0
    %112 = vmatprep.subr.mxu0 0.0
    %113 = vmatpush2.msra.mxu0 0.0
    %114 = vmatprep.subr.mxu0 0.0
    %115 = vmatpush2.msra.mxu0 0.0
    %116 = vmatprep.subr.mxu0 0.0
    %117 = vmatpush2.msra.mxu0 0.0
    %118 = vmatprep.subr.mxu0 0.0
    %119 = vmatpush2.msra.mxu0 0.0
    %120 = vmatprep.subr.mxu0 0.0
    %121 = vmatpush2.msra.mxu0 0.0
    %122 = vmatprep.subr.mxu0 0.0
    %123 = vmatpush2.msra.mxu0 0.0
    %124 = vmatprep.subr.mxu0 0.0
    %125 = vmatpush2.msra.mxu0 0.0
    %126 = vmatprep.subr.mxu0 0.0
    %127 = vmatpush2.msra.mxu0 0.0
    %128 = vmatprep.subr.mxu0 0.0
    %129 = vmatpush2.msra.mxu0 0.0
    %130 = vmatprep.subr.mxu0 0.0
    %131 = vmatpush2.msra.mxu0 0.0
    %132 = vmatprep.subr.mxu0 0.0
    %133 = vmatpush2.msra.mxu0 0.0
    %134 = vmatprep.mubr.f32.mxu0 0.0
    %135 = vmatmul.mubr.f32.gmra.mxu0 %v68
    %v136 = vpop.f32.mrf.mxu0
    %v137 = vadd.f32 0.0, %v136
    %v138 = vpop.f32.mrf.mxu0
    %139 = vdwg.mxu0
    %v140 = vsub.f32 %v54, %v137
    %v141 = vmul.f32 %v140, %v140
    %vm142 = vcmask 15360
    %v143 = vsel %vm142, %v141, 0.0
    %144 = vadd.xlane.f32.xlu0 %v143
    %v145 = vpop.xlane.xlu0 %144
    %s146 = sadd.s32 0, 0
    %s147 = smul.u32 %s146, 8
    %v148 = vlaneseq
    %v149 = vshrl.u32 %v148, 7
    %v150 = vstv %s147
    %v151 = vadd.s32 %v150, %v149
    %vm152 = vcmp.lt.s32.totalorder %v151, 8
    %v153 = vmax.f32 %v145, 1e-12
    %v154 = vmin.f32 %v153, 1e+12
    %v155 = vsel %vm152, %v154, 0.0
    %v156 = vld [vmem:[#allocation2] sm:$0x1]
    %v157 = vrot.slane %v155, 4
    %v158 = vadd.f32 %v155, %v157
    %v159 = vrot.slane %v158, 2
    %v160 = vadd.f32 %v158, %v159
    %v161 = vrot.slane %v160, 1
    %v162 = vadd.f32 %v160, %v161
    %v163 = vadd.f32 %v156, %v162
    %vm164 = vcmask 0
    %165 = vst.msk [vmem:[#allocation2] sm:$0x1] %vm164, %v163
    // Predicated region
    $region18: #{tpu_custom_call.1} parent=1 // pred_check
      _
    $region19: #{tpu_custom_call.1} parent=1 // pred_check_branch
      %167 = sbr.rel (0) target = $region21
    $region20: #{tpu_custom_call.1} parent=1 // pred_region
      %s169 = ssub.s32 128, 128
      %170 = vsyncadd [#allocation3], %s169
      %s172 = sshll.u32 [#allocation2], 4
      %s173 = int_to_ptr.vmem [resolvable:$true] %s172
      %175 = dma.vmem_to_hbm [thread:$0]  %s173, 128, %s3, [#allocation3]
    $region21: #{tpu_custom_call.1} parent=1 // pred_fallthru
      _
    // Predicated region
    $region22: #{tpu_custom_call.1} parent=1 // pred_check
      _
    $region23: #{tpu_custom_call.1} parent=1 // pred_check_branch
      %177 = sbr.rel (0) target = $region25
    $region24: #{tpu_custom_call.1} parent=1 // pred_region
      %178 = dma.done [#allocation3], 128
    $region25: #{tpu_custom_call.1} parent=1 // pred_fallthru
      _
    %179 = vsyncpa [#allocation3], 1

</llo_original>
